<compile_context>
chip_gen: v7x
topology: tpu7x:2x2x1
jax: 0.10.0
libtpu: 0.0.40
codegen_flags: <defaults>
</compile_context>

<pallas_src>
import functools

import jax
import jax.numpy as jnp
from jax.experimental import pallas as pl
from jax.experimental.pallas import tpu as pltpu

_EPS = 1e-07


def _add_eps(x, eps=_EPS):
    # torch add_eps: +eps where x >= 0, -eps where x < 0
    return jnp.where(x < 0, x - eps, x + eps)


def _feature_expansion_kernel(x_ref, o_ref, *, stride: int, D: int):
    # x_ref: (stride, D, WT) VMEM block  -> WT windows, window axis on lanes
    # o_ref: (F, WT) VMEM block          -> F = 4*D + D*(D-1) expanded features
    P = (D * (D - 1)) // 2
    x = x_ref[...]                                   # (stride, D, WT), f32
    inv_s = 1.0 / stride

    # ---- Std / ZScore -------------------------------------------------------
    mean = jnp.sum(x, axis=0) * inv_s                # (D, WT)
    cen = x - mean                                   # (stride, D, WT)
    mse = jnp.sum(cen * cen, axis=0) * inv_s         # (D, WT)
    std = jnp.sqrt(mse)                              # (D, WT)  (unbiased=False)
    zscore = mean / _add_eps(std)                    # (D, WT)

    # ---- LinearDecay (constant weights, unrolled mul-adds) ------------------
    norm = 2.0 / (stride * (stride + 1))
    decay = x[0] * float(1.0 * norm)
    for t in range(1, stride):
        decay = decay + x[t] * float((t + 1) * norm)  # (D, WT)

    # ---- Return -------------------------------------------------------------
    ret = x[stride - 1] / _add_eps(x[0]) - 1.0        # (D, WT)

    # ---- Dense feature groups: lane-dense block stores ----------------------
    o_ref[0:D, :] = std
    o_ref[D:2 * D, :] = zscore
    o_ref[2 * D:3 * D, :] = decay
    o_ref[3 * D:4 * D, :] = ret

    # ---- Covariance / Correlation: VPU pair products, static row writes -----
    cen_f = [cen[:, k:k + 1, :] for k in range(D)]   # each (stride, 1, WT)
    std_f = [std[k:k + 1, :] for k in range(D)]      # each (1, WT)
    inv_cov = 1.0 / (stride - 1)
    p = 0
    for k in range(D):                                # row-major strict-lower order
        for m in range(k):                            # == torch.masked_select order
            s = jnp.sum(cen_f[k] * cen_f[m], axis=0)  # (1, WT)
            o_ref[4 * D + p:4 * D + p + 1, :] = s * inv_cov
            denom = _add_eps(std_f[k] * std_f[m])
            o_ref[4 * D + P + p:4 * D + P + p + 1, :] = (s * inv_s) / denom
            p += 1


def _round_up(v, m):
    return ((v + m - 1) // m) * m


def feature_expansion(x, *, stride: int = 10, windows_per_block: int = 8192):
    """x: (B, L, D) float, L % stride == 0. Returns (B, L//stride, 4*D + D*(D-1))."""
    B, L, D = x.shape
    assert L % stride == 0
    W = B * (L // stride)
    P = (D * (D - 1)) // 2
    F = 4 * D + 2 * P

    # Window axis -> lanes: (W, stride, D) -> (stride, D, W), f32.
    x_win = jnp.transpose(x.reshape(W, stride, D).astype(jnp.float32), (1, 2, 0))

    # Tile size: many windows per grid step, lane-aligned (multiple of 128).
    if W >= windows_per_block:
        WT = windows_per_block
    else:
        WT = max(128, _round_up(W, 128))
    W_pad = _round_up(W, WT)
    if W_pad != W:
        x_win = jnp.pad(x_win, ((0, 0), (0, 0), (0, W_pad - W)))

    kernel = functools.partial(_feature_expansion_kernel, stride=stride, D=D)
    out = pl.pallas_call(
        kernel,
        out_shape=jax.ShapeDtypeStruct((F, W_pad), jnp.float32),
        grid=(W_pad // WT,),
        in_specs=[pl.BlockSpec((stride, D, WT), lambda w: (0, 0, w))],
        out_specs=pl.BlockSpec((F, WT), lambda w: (0, w)),
        compiler_params=pltpu.CompilerParams(
            dimension_semantics=("parallel",)),
    )(x_win)

    out = out[:, :W]                                  # drop lane padding
    return jnp.transpose(out, (1, 0)).reshape(B, L // stride, F)


def _feature_expansion_ref(x, stride):
    """Pure-JAX reference mirroring the PyTorch module."""
    B, L, D = x.shape
    W = B * L // stride
    xw = x.reshape(W, stride, D)
    mean = xw.mean(axis=1)
    cen = xw - mean[:, None, :]
    std = jnp.sqrt((cen ** 2).mean(axis=1))
    z = mean / _add_eps(std)
    w = jnp.arange(1, stride + 1, dtype=x.dtype)
    w = w / w.sum()
    decay = (xw * w[None, :, None]).sum(axis=1)
    ret = xw[:, stride - 1, :] / _add_eps(xw[:, 0, :]) - 1.0
    C = jnp.einsum('wjk,wjm->wkm', cen, cen)
    cov = C / (stride - 1)
    denom = _add_eps(jnp.einsum('wk,wm->wkm', std, std))
    corr = (C / stride) / denom
    rows, cols = jnp.tril_indices(D, -1)   # row-major strictly-lower order
    cov_sel = cov[:, rows, cols]
    corr_sel = corr[:, rows, cols]
    out = jnp.concatenate([std, z, decay, ret, cov_sel, corr_sel], axis=1)
    return out.reshape(B, L // stride, -1)


if __name__ == "__main__":
    B, L, D, stride = 2, 80, 4, 10
    key = jax.random.PRNGKey(0)
    x = jax.random.normal(key, (B, L, D), dtype=jnp.float32) + 1.5

    out = feature_expansion(x, stride=stride)
    out = jax.block_until_ready(out)

    ref = jax.block_until_ready(_feature_expansion_ref(x, stride))
    assert out.shape == (B, L // stride, 4 * D + D * (D - 1)), out.shape
    assert jnp.allclose(out, ref, atol=1e-4, rtol=1e-4), float(jnp.max(jnp.abs(out - ref)))

    print("KERNEL_OK")
</pallas_src>

<mosaic_0001>
module attributes {stable_mosaic.version = 11 : i64} {
  func.func @_feature_expansion_kernel(%arg0: i32, %arg1: memref<10x4x128xf32, #tpu.memory_space<vmem>>, %arg2: memref<28x128xf32, #tpu.memory_space<vmem>>) attributes {dimension_semantics = [#tpu.dimension_semantics<parallel>], iteration_bounds = array<i64: 1>, scalar_prefetch = 0 : i64, scratch_operands = 0 : i64, tpu.core_type = #tpu.core_type<tc>, window_params = [{transform_indices = @transform_0, window_bounds = array<i64: 10, 4, 128>}, {transform_indices = @transform_1, window_bounds = array<i64: 28, 128>}]} {
    %c0 = arith.constant 0 : index
    %c0_0 = arith.constant 0 : index
    %c0_1 = arith.constant 0 : index
    %0 = vector.load %arg1[%c0, %c0_0, %c0_1] : memref<10x4x128xf32, #tpu.memory_space<vmem>>, vector<10x4x128xf32>
    %cst = arith.constant dense<0.000000e+00> : vector<4x128xf32>
    %1 = vector.multi_reduction <add>, %0, %cst [0] : vector<10x4x128xf32> to vector<4x128xf32>
    %cst_2 = arith.constant 1.000000e-01 : f32
    %2 = vector.broadcast %cst_2 : f32 to vector<4x128xf32>
    %3 = arith.mulf %1, %2 : vector<4x128xf32>
    %4 = vector.shape_cast %3 : vector<4x128xf32> to vector<1x4x128xf32>
    %5 = vector.broadcast %4 : vector<1x4x128xf32> to vector<10x4x128xf32>
    %6 = arith.subf %0, %5 : vector<10x4x128xf32>
    %7 = arith.mulf %6, %6 : vector<10x4x128xf32>
    %cst_3 = arith.constant dense<0.000000e+00> : vector<4x128xf32>
    %8 = vector.multi_reduction <add>, %7, %cst_3 [0] : vector<10x4x128xf32> to vector<4x128xf32>
    %cst_4 = arith.constant 1.000000e-01 : f32
    %9 = vector.broadcast %cst_4 : f32 to vector<4x128xf32>
    %10 = arith.mulf %8, %9 : vector<4x128xf32>
    %11 = math.sqrt %10 : vector<4x128xf32>
    %cst_5 = arith.constant 0.000000e+00 : f32
    %12 = vector.broadcast %cst_5 : f32 to vector<4x128xf32>
    %13 = arith.cmpf olt, %11, %12 : vector<4x128xf32>
    %cst_6 = arith.constant 1.000000e-07 : f32
    %14 = vector.broadcast %cst_6 : f32 to vector<4x128xf32>
    %15 = arith.subf %11, %14 : vector<4x128xf32>
    %cst_7 = arith.constant 1.000000e-07 : f32
    %16 = vector.broadcast %cst_7 : f32 to vector<4x128xf32>
    %17 = arith.addf %11, %16 : vector<4x128xf32>
    %18 = arith.select %13, %15, %17 : vector<4x128xi1>, vector<4x128xf32>
    %19 = arith.divf %3, %18 : vector<4x128xf32>
    %20 = vector.extract_strided_slice %0 {offsets = [0, 0, 0], sizes = [1, 4, 128], strides = [1, 1, 1]} : vector<10x4x128xf32> to vector<1x4x128xf32>
    %21 = vector.shape_cast %20 : vector<1x4x128xf32> to vector<4x128xf32>
    %cst_8 = arith.constant 0.0181818176 : f32
    %22 = vector.broadcast %cst_8 : f32 to vector<4x128xf32>
    %23 = arith.mulf %21, %22 : vector<4x128xf32>
    %24 = vector.extract_strided_slice %0 {offsets = [1, 0, 0], sizes = [1, 4, 128], strides = [1, 1, 1]} : vector<10x4x128xf32> to vector<1x4x128xf32>
    %25 = vector.shape_cast %24 : vector<1x4x128xf32> to vector<4x128xf32>
    %cst_9 = arith.constant 0.0363636352 : f32
    %26 = vector.broadcast %cst_9 : f32 to vector<4x128xf32>
    %27 = arith.mulf %25, %26 : vector<4x128xf32>
    %28 = arith.addf %23, %27 : vector<4x128xf32>
    %29 = vector.extract_strided_slice %0 {offsets = [2, 0, 0], sizes = [1, 4, 128], strides = [1, 1, 1]} : vector<10x4x128xf32> to vector<1x4x128xf32>
    %30 = vector.shape_cast %29 : vector<1x4x128xf32> to vector<4x128xf32>
    %cst_10 = arith.constant 0.0545454547 : f32
    %31 = vector.broadcast %cst_10 : f32 to vector<4x128xf32>
    %32 = arith.mulf %30, %31 : vector<4x128xf32>
    %33 = arith.addf %28, %32 : vector<4x128xf32>
    %34 = vector.extract_strided_slice %0 {offsets = [3, 0, 0], sizes = [1, 4, 128], strides = [1, 1, 1]} : vector<10x4x128xf32> to vector<1x4x128xf32>
    %35 = vector.shape_cast %34 : vector<1x4x128xf32> to vector<4x128xf32>
    %cst_11 = arith.constant 0.0727272704 : f32
    %36 = vector.broadcast %cst_11 : f32 to vector<4x128xf32>
    %37 = arith.mulf %35, %36 : vector<4x128xf32>
    %38 = arith.addf %33, %37 : vector<4x128xf32>
    %39 = vector.extract_strided_slice %0 {offsets = [4, 0, 0], sizes = [1, 4, 128], strides = [1, 1, 1]} : vector<10x4x128xf32> to vector<1x4x128xf32>
    %40 = vector.shape_cast %39 : vector<1x4x128xf32> to vector<4x128xf32>
    %cst_12 = arith.constant 0.0909090936 : f32
    %41 = vector.broadcast %cst_12 : f32 to vector<4x128xf32>
    %42 = arith.mulf %40, %41 : vector<4x128xf32>
    %43 = arith.addf %38, %42 : vector<4x128xf32>
    %44 = vector.extract_strided_slice %0 {offsets = [5, 0, 0], sizes = [1, 4, 128], strides = [1, 1, 1]} : vector<10x4x128xf32> to vector<1x4x128xf32>
    %45 = vector.shape_cast %44 : vector<1x4x128xf32> to vector<4x128xf32>
    %cst_13 = arith.constant 0.109090909 : f32
    %46 = vector.broadcast %cst_13 : f32 to vector<4x128xf32>
    %47 = arith.mulf %45, %46 : vector<4x128xf32>
    %48 = arith.addf %43, %47 : vector<4x128xf32>
    %49 = vector.extract_strided_slice %0 {offsets = [6, 0, 0], sizes = [1, 4, 128], strides = [1, 1, 1]} : vector<10x4x128xf32> to vector<1x4x128xf32>
    %50 = vector.shape_cast %49 : vector<1x4x128xf32> to vector<4x128xf32>
    %cst_14 = arith.constant 0.127272725 : f32
    %51 = vector.broadcast %cst_14 : f32 to vector<4x128xf32>
    %52 = arith.mulf %50, %51 : vector<4x128xf32>
    %53 = arith.addf %48, %52 : vector<4x128xf32>
    %54 = vector.extract_strided_slice %0 {offsets = [7, 0, 0], sizes = [1, 4, 128], strides = [1, 1, 1]} : vector<10x4x128xf32> to vector<1x4x128xf32>
    %55 = vector.shape_cast %54 : vector<1x4x128xf32> to vector<4x128xf32>
    %cst_15 = arith.constant 0.145454541 : f32
    %56 = vector.broadcast %cst_15 : f32 to vector<4x128xf32>
    %57 = arith.mulf %55, %56 : vector<4x128xf32>
    %58 = arith.addf %53, %57 : vector<4x128xf32>
    %59 = vector.extract_strided_slice %0 {offsets = [8, 0, 0], sizes = [1, 4, 128], strides = [1, 1, 1]} : vector<10x4x128xf32> to vector<1x4x128xf32>
    %60 = vector.shape_cast %59 : vector<1x4x128xf32> to vector<4x128xf32>
    %cst_16 = arith.constant 0.163636357 : f32
    %61 = vector.broadcast %cst_16 : f32 to vector<4x128xf32>
    %62 = arith.mulf %60, %61 : vector<4x128xf32>
    %63 = arith.addf %58, %62 : vector<4x128xf32>
    %64 = vector.extract_strided_slice %0 {offsets = [9, 0, 0], sizes = [1, 4, 128], strides = [1, 1, 1]} : vector<10x4x128xf32> to vector<1x4x128xf32>
    %65 = vector.shape_cast %64 : vector<1x4x128xf32> to vector<4x128xf32>
    %cst_17 = arith.constant 0.181818187 : f32
    %66 = vector.broadcast %cst_17 : f32 to vector<4x128xf32>
    %67 = arith.mulf %65, %66 : vector<4x128xf32>
    %68 = arith.addf %63, %67 : vector<4x128xf32>
    %69 = vector.extract_strided_slice %0 {offsets = [9, 0, 0], sizes = [1, 4, 128], strides = [1, 1, 1]} : vector<10x4x128xf32> to vector<1x4x128xf32>
    %70 = vector.shape_cast %69 : vector<1x4x128xf32> to vector<4x128xf32>
    %71 = vector.extract_strided_slice %0 {offsets = [0, 0, 0], sizes = [1, 4, 128], strides = [1, 1, 1]} : vector<10x4x128xf32> to vector<1x4x128xf32>
    %72 = vector.shape_cast %71 : vector<1x4x128xf32> to vector<4x128xf32>
    %cst_18 = arith.constant 0.000000e+00 : f32
    %73 = vector.broadcast %cst_18 : f32 to vector<4x128xf32>
    %74 = arith.cmpf olt, %72, %73 : vector<4x128xf32>
    %cst_19 = arith.constant 1.000000e-07 : f32
    %75 = vector.broadcast %cst_19 : f32 to vector<4x128xf32>
    %76 = arith.subf %72, %75 : vector<4x128xf32>
    %cst_20 = arith.constant 1.000000e-07 : f32
    %77 = vector.broadcast %cst_20 : f32 to vector<4x128xf32>
    %78 = arith.addf %72, %77 : vector<4x128xf32>
    %79 = arith.select %74, %76, %78 : vector<4x128xi1>, vector<4x128xf32>
    %80 = arith.divf %70, %79 : vector<4x128xf32>
    %cst_21 = arith.constant 1.000000e+00 : f32
    %81 = vector.broadcast %cst_21 : f32 to vector<4x128xf32>
    %82 = arith.subf %80, %81 : vector<4x128xf32>
    %c0_22 = arith.constant 0 : index
    %c0_23 = arith.constant 0 : index
    %83 = vector.load %arg2[%c0_22, %c0_23] : memref<28x128xf32, #tpu.memory_space<vmem>>, vector<4x128xf32>
    tpu.vector_store %arg2[%c0_22, %c0_23], %11 {strides = array<i32>} : memref<28x128xf32, #tpu.memory_space<vmem>>, vector<4x128xf32>,
    %c4 = arith.constant 4 : index
    %c0_24 = arith.constant 0 : index
    %84 = vector.load %arg2[%c4, %c0_24] : memref<28x128xf32, #tpu.memory_space<vmem>>, vector<4x128xf32>
    tpu.vector_store %arg2[%c4, %c0_24], %19 {strides = array<i32>} : memref<28x128xf32, #tpu.memory_space<vmem>>, vector<4x128xf32>,
    %c8 = arith.constant 8 : index
    %c0_25 = arith.constant 0 : index
    %85 = vector.load %arg2[%c8, %c0_25] : memref<28x128xf32, #tpu.memory_space<vmem>>, vector<4x128xf32>
    tpu.vector_store %arg2[%c8, %c0_25], %68 {strides = array<i32>} : memref<28x128xf32, #tpu.memory_space<vmem>>, vector<4x128xf32>,
    %c12 = arith.constant 12 : index
    %c0_26 = arith.constant 0 : index
    %86 = vector.load %arg2[%c12, %c0_26] : memref<28x128xf32, #tpu.memory_space<vmem>>, vector<4x128xf32>
    tpu.vector_store %arg2[%c12, %c0_26], %82 {strides = array<i32>} : memref<28x128xf32, #tpu.memory_space<vmem>>, vector<4x128xf32>,
    %87 = vector.extract_strided_slice %6 {offsets = [0, 0, 0], sizes = [10, 1, 128], strides = [1, 1, 1]} : vector<10x4x128xf32> to vector<10x1x128xf32>
    %88 = vector.extract_strided_slice %6 {offsets = [0, 1, 0], sizes = [10, 1, 128], strides = [1, 1, 1]} : vector<10x4x128xf32> to vector<10x1x128xf32>
    %89 = vector.extract_strided_slice %6 {offsets = [0, 2, 0], sizes = [10, 1, 128], strides = [1, 1, 1]} : vector<10x4x128xf32> to vector<10x1x128xf32>
    %90 = vector.extract_strided_slice %6 {offsets = [0, 3, 0], sizes = [10, 1, 128], strides = [1, 1, 1]} : vector<10x4x128xf32> to vector<10x1x128xf32>
    %91 = vector.extract_strided_slice %11 {offsets = [0, 0], sizes = [1, 128], strides = [1, 1]} : vector<4x128xf32> to vector<1x128xf32>
    %92 = vector.extract_strided_slice %11 {offsets = [1, 0], sizes = [1, 128], strides = [1, 1]} : vector<4x128xf32> to vector<1x128xf32>
    %93 = vector.extract_strided_slice %11 {offsets = [2, 0], sizes = [1, 128], strides = [1, 1]} : vector<4x128xf32> to vector<1x128xf32>
    %94 = vector.extract_strided_slice %11 {offsets = [3, 0], sizes = [1, 128], strides = [1, 1]} : vector<4x128xf32> to vector<1x128xf32>
    %95 = arith.mulf %88, %87 : vector<10x1x128xf32>
    %cst_27 = arith.constant dense<0.000000e+00> : vector<1x128xf32>
    %96 = vector.multi_reduction <add>, %95, %cst_27 [0] : vector<10x1x128xf32> to vector<1x128xf32>
    %cst_28 = arith.constant 0.111111112 : f32
    %97 = vector.broadcast %cst_28 : f32 to vector<1x128xf32>
    %98 = arith.mulf %96, %97 : vector<1x128xf32>
    %c16 = arith.constant 16 : index
    %c0_29 = arith.constant 0 : index
    %99 = vector.load %arg2[%c16, %c0_29] : memref<28x128xf32, #tpu.memory_space<vmem>>, vector<1x128xf32>
    tpu.vector_store %arg2[%c16, %c0_29], %98 {strides = array<i32>} : memref<28x128xf32, #tpu.memory_space<vmem>>, vector<1x128xf32>,
    %100 = arith.mulf %92, %91 : vector<1x128xf32>
    %cst_30 = arith.constant 0.000000e+00 : f32
    %101 = vector.broadcast %cst_30 : f32 to vector<1x128xf32>
    %102 = arith.cmpf olt, %100, %101 : vector<1x128xf32>
    %cst_31 = arith.constant 1.000000e-07 : f32
    %103 = vector.broadcast %cst_31 : f32 to vector<1x128xf32>
    %104 = arith.subf %100, %103 : vector<1x128xf32>
    %cst_32 = arith.constant 1.000000e-07 : f32
    %105 = vector.broadcast %cst_32 : f32 to vector<1x128xf32>
    %106 = arith.addf %100, %105 : vector<1x128xf32>
    %107 = arith.select %102, %104, %106 : vector<1x128xi1>, vector<1x128xf32>
    %cst_33 = arith.constant 1.000000e-01 : f32
    %108 = vector.broadcast %cst_33 : f32 to vector<1x128xf32>
    %109 = arith.mulf %96, %108 : vector<1x128xf32>
    %110 = arith.divf %109, %107 : vector<1x128xf32>
    %c22 = arith.constant 22 : index
    %c0_34 = arith.constant 0 : index
    %111 = vector.load %arg2[%c22, %c0_34] : memref<28x128xf32, #tpu.memory_space<vmem>>, vector<1x128xf32>
    tpu.vector_store %arg2[%c22, %c0_34], %110 {strides = array<i32>} : memref<28x128xf32, #tpu.memory_space<vmem>>, vector<1x128xf32>,
    %112 = arith.mulf %89, %87 : vector<10x1x128xf32>
    %cst_35 = arith.constant dense<0.000000e+00> : vector<1x128xf32>
    %113 = vector.multi_reduction <add>, %112, %cst_35 [0] : vector<10x1x128xf32> to vector<1x128xf32>
    %cst_36 = arith.constant 0.111111112 : f32
    %114 = vector.broadcast %cst_36 : f32 to vector<1x128xf32>
    %115 = arith.mulf %113, %114 : vector<1x128xf32>
    %c17 = arith.constant 17 : index
    %c0_37 = arith.constant 0 : index
    %116 = vector.load %arg2[%c17, %c0_37] : memref<28x128xf32, #tpu.memory_space<vmem>>, vector<1x128xf32>
    tpu.vector_store %arg2[%c17, %c0_37], %115 {strides = array<i32>} : memref<28x128xf32, #tpu.memory_space<vmem>>, vector<1x128xf32>,
    %117 = arith.mulf %93, %91 : vector<1x128xf32>
    %cst_38 = arith.constant 0.000000e+00 : f32
    %118 = vector.broadcast %cst_38 : f32 to vector<1x128xf32>
    %119 = arith.cmpf olt, %117, %118 : vector<1x128xf32>
    %cst_39 = arith.constant 1.000000e-07 : f32
    %120 = vector.broadcast %cst_39 : f32 to vector<1x128xf32>
    %121 = arith.subf %117, %120 : vector<1x128xf32>
    %cst_40 = arith.constant 1.000000e-07 : f32
    %122 = vector.broadcast %cst_40 : f32 to vector<1x128xf32>
    %123 = arith.addf %117, %122 : vector<1x128xf32>
    %124 = arith.select %119, %121, %123 : vector<1x128xi1>, vector<1x128xf32>
    %cst_41 = arith.constant 1.000000e-01 : f32
    %125 = vector.broadcast %cst_41 : f32 to vector<1x128xf32>
    %126 = arith.mulf %113, %125 : vector<1x128xf32>
    %127 = arith.divf %126, %124 : vector<1x128xf32>
    %c23 = arith.constant 23 : index
    %c0_42 = arith.constant 0 : index
    %128 = vector.load %arg2[%c23, %c0_42] : memref<28x128xf32, #tpu.memory_space<vmem>>, vector<1x128xf32>
    tpu.vector_store %arg2[%c23, %c0_42], %127 {strides = array<i32>} : memref<28x128xf32, #tpu.memory_space<vmem>>, vector<1x128xf32>,
    %129 = arith.mulf %89, %88 : vector<10x1x128xf32>
    %cst_43 = arith.constant dense<0.000000e+00> : vector<1x128xf32>
    %130 = vector.multi_reduction <add>, %129, %cst_43 [0] : vector<10x1x128xf32> to vector<1x128xf32>
    %cst_44 = arith.constant 0.111111112 : f32
    %131 = vector.broadcast %cst_44 : f32 to vector<1x128xf32>
    %132 = arith.mulf %130, %131 : vector<1x128xf32>
    %c18 = arith.constant 18 : index
    %c0_45 = arith.constant 0 : index
    %133 = vector.load %arg2[%c18, %c0_45] : memref<28x128xf32, #tpu.memory_space<vmem>>, vector<1x128xf32>
    tpu.vector_store %arg2[%c18, %c0_45], %132 {strides = array<i32>} : memref<28x128xf32, #tpu.memory_space<vmem>>, vector<1x128xf32>,
    %134 = arith.mulf %93, %92 : vector<1x128xf32>
    %cst_46 = arith.constant 0.000000e+00 : f32
    %135 = vector.broadcast %cst_46 : f32 to vector<1x128xf32>
    %136 = arith.cmpf olt, %134, %135 : vector<1x128xf32>
    %cst_47 = arith.constant 1.000000e-07 : f32
    %137 = vector.broadcast %cst_47 : f32 to vector<1x128xf32>
    %138 = arith.subf %134, %137 : vector<1x128xf32>
    %cst_48 = arith.constant 1.000000e-07 : f32
    %139 = vector.broadcast %cst_48 : f32 to vector<1x128xf32>
    %140 = arith.addf %134, %139 : vector<1x128xf32>
    %141 = arith.select %136, %138, %140 : vector<1x128xi1>, vector<1x128xf32>
    %cst_49 = arith.constant 1.000000e-01 : f32
    %142 = vector.broadcast %cst_49 : f32 to vector<1x128xf32>
    %143 = arith.mulf %130, %142 : vector<1x128xf32>
    %144 = arith.divf %143, %141 : vector<1x128xf32>
    %c24 = arith.constant 24 : index
    %c0_50 = arith.constant 0 : index
    %145 = vector.load %arg2[%c24, %c0_50] : memref<28x128xf32, #tpu.memory_space<vmem>>, vector<1x128xf32>
    tpu.vector_store %arg2[%c24, %c0_50], %144 {strides = array<i32>} : memref<28x128xf32, #tpu.memory_space<vmem>>, vector<1x128xf32>,
    %146 = arith.mulf %90, %87 : vector<10x1x128xf32>
    %cst_51 = arith.constant dense<0.000000e+00> : vector<1x128xf32>
    %147 = vector.multi_reduction <add>, %146, %cst_51 [0] : vector<10x1x128xf32> to vector<1x128xf32>
    %cst_52 = arith.constant 0.111111112 : f32
    %148 = vector.broadcast %cst_52 : f32 to vector<1x128xf32>
    %149 = arith.mulf %147, %148 : vector<1x128xf32>
    %c19 = arith.constant 19 : index
    %c0_53 = arith.constant 0 : index
    %150 = vector.load %arg2[%c19, %c0_53] : memref<28x128xf32, #tpu.memory_space<vmem>>, vector<1x128xf32>
    tpu.vector_store %arg2[%c19, %c0_53], %149 {strides = array<i32>} : memref<28x128xf32, #tpu.memory_space<vmem>>, vector<1x128xf32>,
    %151 = arith.mulf %94, %91 : vector<1x128xf32>
    %cst_54 = arith.constant 0.000000e+00 : f32
    %152 = vector.broadcast %cst_54 : f32 to vector<1x128xf32>
    %153 = arith.cmpf olt, %151, %152 : vector<1x128xf32>
    %cst_55 = arith.constant 1.000000e-07 : f32
    %154 = vector.broadcast %cst_55 : f32 to vector<1x128xf32>
    %155 = arith.subf %151, %154 : vector<1x128xf32>
    %cst_56 = arith.constant 1.000000e-07 : f32
    %156 = vector.broadcast %cst_56 : f32 to vector<1x128xf32>
    %157 = arith.addf %151, %156 : vector<1x128xf32>
    %158 = arith.select %153, %155, %157 : vector<1x128xi1>, vector<1x128xf32>
    %cst_57 = arith.constant 1.000000e-01 : f32
    %159 = vector.broadcast %cst_57 : f32 to vector<1x128xf32>
    %160 = arith.mulf %147, %159 : vector<1x128xf32>
    %161 = arith.divf %160, %158 : vector<1x128xf32>
    %c25 = arith.constant 25 : index
    %c0_58 = arith.constant 0 : index
    %162 = vector.load %arg2[%c25, %c0_58] : memref<28x128xf32, #tpu.memory_space<vmem>>, vector<1x128xf32>
    tpu.vector_store %arg2[%c25, %c0_58], %161 {strides = array<i32>} : memref<28x128xf32, #tpu.memory_space<vmem>>, vector<1x128xf32>,
    %163 = arith.mulf %90, %88 : vector<10x1x128xf32>
    %cst_59 = arith.constant dense<0.000000e+00> : vector<1x128xf32>
    %164 = vector.multi_reduction <add>, %163, %cst_59 [0] : vector<10x1x128xf32> to vector<1x128xf32>
    %cst_60 = arith.constant 0.111111112 : f32
    %165 = vector.broadcast %cst_60 : f32 to vector<1x128xf32>
    %166 = arith.mulf %164, %165 : vector<1x128xf32>
    %c20 = arith.constant 20 : index
    %c0_61 = arith.constant 0 : index
    %167 = vector.load %arg2[%c20, %c0_61] : memref<28x128xf32, #tpu.memory_space<vmem>>, vector<1x128xf32>
    tpu.vector_store %arg2[%c20, %c0_61], %166 {strides = array<i32>} : memref<28x128xf32, #tpu.memory_space<vmem>>, vector<1x128xf32>,
    %168 = arith.mulf %94, %92 : vector<1x128xf32>
    %cst_62 = arith.constant 0.000000e+00 : f32
    %169 = vector.broadcast %cst_62 : f32 to vector<1x128xf32>
    %170 = arith.cmpf olt, %168, %169 : vector<1x128xf32>
    %cst_63 = arith.constant 1.000000e-07 : f32
    %171 = vector.broadcast %cst_63 : f32 to vector<1x128xf32>
    %172 = arith.subf %168, %171 : vector<1x128xf32>
    %cst_64 = arith.constant 1.000000e-07 : f32
    %173 = vector.broadcast %cst_64 : f32 to vector<1x128xf32>
    %174 = arith.addf %168, %173 : vector<1x128xf32>
    %175 = arith.select %170, %172, %174 : vector<1x128xi1>, vector<1x128xf32>
    %cst_65 = arith.constant 1.000000e-01 : f32
    %176 = vector.broadcast %cst_65 : f32 to vector<1x128xf32>
    %177 = arith.mulf %164, %176 : vector<1x128xf32>
    %178 = arith.divf %177, %175 : vector<1x128xf32>
    %c26 = arith.constant 26 : index
    %c0_66 = arith.constant 0 : index
    %179 = vector.load %arg2[%c26, %c0_66] : memref<28x128xf32, #tpu.memory_space<vmem>>, vector<1x128xf32>
    tpu.vector_store %arg2[%c26, %c0_66], %178 {strides = array<i32>} : memref<28x128xf32, #tpu.memory_space<vmem>>, vector<1x128xf32>,
    %180 = arith.mulf %90, %89 : vector<10x1x128xf32>
    %cst_67 = arith.constant dense<0.000000e+00> : vector<1x128xf32>
    %181 = vector.multi_reduction <add>, %180, %cst_67 [0] : vector<10x1x128xf32> to vector<1x128xf32>
    %cst_68 = arith.constant 0.111111112 : f32
    %182 = vector.broadcast %cst_68 : f32 to vector<1x128xf32>
    %183 = arith.mulf %181, %182 : vector<1x128xf32>
    %c21 = arith.constant 21 : index
    %c0_69 = arith.constant 0 : index
    %184 = vector.load %arg2[%c21, %c0_69] : memref<28x128xf32, #tpu.memory_space<vmem>>, vector<1x128xf32>
    tpu.vector_store %arg2[%c21, %c0_69], %183 {strides = array<i32>} : memref<28x128xf32, #tpu.memory_space<vmem>>, vector<1x128xf32>,
    %185 = arith.mulf %94, %93 : vector<1x128xf32>
    %cst_70 = arith.constant 0.000000e+00 : f32
    %186 = vector.broadcast %cst_70 : f32 to vector<1x128xf32>
    %187 = arith.cmpf olt, %185, %186 : vector<1x128xf32>
    %cst_71 = arith.constant 1.000000e-07 : f32
    %188 = vector.broadcast %cst_71 : f32 to vector<1x128xf32>
    %189 = arith.subf %185, %188 : vector<1x128xf32>
    %cst_72 = arith.constant 1.000000e-07 : f32
    %190 = vector.broadcast %cst_72 : f32 to vector<1x128xf32>
    %191 = arith.addf %185, %190 : vector<1x128xf32>
    %192 = arith.select %187, %189, %191 : vector<1x128xi1>, vector<1x128xf32>
    %cst_73 = arith.constant 1.000000e-01 : f32
    %193 = vector.broadcast %cst_73 : f32 to vector<1x128xf32>
    %194 = arith.mulf %181, %193 : vector<1x128xf32>
    %195 = arith.divf %194, %192 : vector<1x128xf32>
    %c27 = arith.constant 27 : index
    %c0_74 = arith.constant 0 : index
    %196 = vector.load %arg2[%c27, %c0_74] : memref<28x128xf32, #tpu.memory_space<vmem>>, vector<1x128xf32>
    tpu.vector_store %arg2[%c27, %c0_74], %195 {strides = array<i32>} : memref<28x128xf32, #tpu.memory_space<vmem>>, vector<1x128xf32>,
    return
  }
  func.func @transform_0(%arg0: i32) -> (i32, i32, i32) {
    %c0_i32 = arith.constant 0 : i32
    %c0_i32_0 = arith.constant 0 : i32
    %c0_i32_1 = arith.constant 0 : i32
    return %c0_i32, %c0_i32_0, %arg0 : i32, i32, i32
  }
  func.func @transform_1(%arg0: i32) -> (i32, i32) {
    %c0_i32 = arith.constant 0 : i32
    %c0_i32_0 = arith.constant 0 : i32
    return %c0_i32, %arg0 : i32, i32
  }
}

</mosaic_0001>

<llo_original>
// kernel: tpu_custom_call.1
$region0: #{tpu_custom_call.1}
  #allocation0 [shape = 'u32[]', space=smem, size = 0x4, offset = 0x4, fixed_abs, tag = 'smem constant byte address 0x4 - core index']
  #allocation1 [shape = 'u32[144,128]{1,0:T(1,128)}', space=vmem, size = 0x12000, scoped, tag = 'internal scratch']
  %s0 = inlined_call_operand.hbm [shape: f32[10,4,128], index: 0, kind: input, shape index: {}]
  %s1 = inlined_call_operand.hbm [shape: f32[28,128], index: 1, kind: output, shape index: {}]
  %s2 = sld [smem:[#allocation0]]
  $region18: #{tpu_custom_call.1} parent=0
    _
  %s4 = ssub.s32 1, %s2
  %s5 = scalar_select 0, %s4, %s2
  $region1: #{tpu_custom_call.1} parent=0
    #allocation2 [shape = 'u8[20480]{0}', space=vmem, size = 0x5000, scoped, tag = 'input window, operand 0, single buffered']
    #allocation3 [shape = 's32[1]{0}', space=sflag, size = 0x4, scoped, tag = 'scoped memory for tpu_custom_call.1']
    #allocation4 [shape = 's32[1]{0}', space=sflag, size = 0x4, scoped, tag = 'scoped memory for tpu_custom_call.1']
    #allocation5 [shape = 'u8[16384]{0}', space=vmem, size = 0x4000, scoped, tag = 'output window, operand 0, single buffered']
    %6 = vsyncpa [#allocation3], 0
    %7 = vsyncpa [#allocation4], 0
    // Predicated region
    $region2: #{tpu_custom_call.1} parent=1 // pred_check
      _
    $region3: #{tpu_custom_call.1} parent=1 // pred_check_branch
      %9 = sbr.rel (0) target = $region5
    $region4: #{tpu_custom_call.1} parent=1 // pred_region
      %s11 = ssub.s32 640, 640
      %12 = vsyncadd [#allocation3], %s11
      %s13 = sshll.u32 [#allocation2], 4
      %s14 = int_to_ptr.vmem [resolvable:$true] %s13
      %19 = dma.hbm_to_vmem [thread:$0]  %s0, 640, %s14, [#allocation3], 64, 64, 4
    $region5: #{tpu_custom_call.1} parent=1 // pred_fallthru
      _
    // Predicated region
    $region6: #{tpu_custom_call.1} parent=1 // pred_check
      _
    $region7: #{tpu_custom_call.1} parent=1 // pred_check_branch
      %21 = sbr.rel (0) target = $region9
    $region8: #{tpu_custom_call.1} parent=1 // pred_region
      %22 = dma.done [#allocation3], 640
    $region9: #{tpu_custom_call.1} parent=1 // pred_fallthru
      _
    %v23 = vld [vmem:[#allocation2] sm:$0xf]
    %v24 = vld [vmem:[#allocation2 + $0x4] sm:$0xf]
    %v25 = vld [vmem:[#allocation2 + $0x8] sm:$0xf]
    %v26 = vld [vmem:[#allocation2 + $0xc] sm:$0xf]
    %v27 = vld [vmem:[#allocation2 + $0x10] sm:$0xf]
    %v28 = vld [vmem:[#allocation2 + $0x14] sm:$0xf]
    %v29 = vld [vmem:[#allocation2 + $0x18] sm:$0xf]
    %v30 = vld [vmem:[#allocation2 + $0x1c] sm:$0xf]
    %v31 = vld [vmem:[#allocation2 + $0x20] sm:$0xf]
    %v32 = vld [vmem:[#allocation2 + $0x24] sm:$0xf]
    %vm33 = vcmask 1043456
    %v34 = vsel %vm33, %v23, 0.0
    %v35 = vsel %vm33, %v24, 0.0
    %v36 = vadd.f32 %v34, %v35
    %v37 = vsel %vm33, %v25, 0.0
    %v38 = vadd.f32 %v36, %v37
    %v39 = vsel %vm33, %v26, 0.0
    %v40 = vadd.f32 %v38, %v39
    %v41 = vsel %vm33, %v27, 0.0
    %v42 = vadd.f32 %v40, %v41
    %v43 = vsel %vm33, %v28, 0.0
    %v44 = vadd.f32 %v42, %v43
    %v45 = vsel %vm33, %v29, 0.0
    %v46 = vadd.f32 %v44, %v45
    %v47 = vsel %vm33, %v30, 0.0
    %v48 = vadd.f32 %v46, %v47
    %v49 = vsel %vm33, %v31, 0.0
    %v50 = vadd.f32 %v48, %v49
    %v51 = vsel %vm33, %v32, 0.0
    %v52 = vadd.f32 %v50, %v51
    %v53 = vmul.f32 %v52, 0.1
    %v54 = vsub.f32 %v23, %v53
    %v55 = vsub.f32 %v24, %v53
    %v56 = vsub.f32 %v25, %v53
    %v57 = vsub.f32 %v26, %v53
    %v58 = vsub.f32 %v27, %v53
    %v59 = vsub.f32 %v28, %v53
    %v60 = vsub.f32 %v29, %v53
    %v61 = vsub.f32 %v30, %v53
    %v62 = vsub.f32 %v31, %v53
    %v63 = vsub.f32 %v32, %v53
    %v64 = vmul.f32 %v54, %v54
    %v65 = vmul.f32 %v55, %v55
    %v66 = vmul.f32 %v56, %v56
    %v67 = vmul.f32 %v57, %v57
    %v68 = vmul.f32 %v58, %v58
    %v69 = vmul.f32 %v59, %v59
    %v70 = vmul.f32 %v60, %v60
    %v71 = vmul.f32 %v61, %v61
    %v72 = vmul.f32 %v62, %v62
    %v73 = vmul.f32 %v63, %v63
    %v74 = vsel %vm33, %v64, 0.0
    %v75 = vsel %vm33, %v65, 0.0
    %v76 = vadd.f32 %v74, %v75
    %v77 = vsel %vm33, %v66, 0.0
    %v78 = vadd.f32 %v76, %v77
    %v79 = vsel %vm33, %v67, 0.0
    %v80 = vadd.f32 %v78, %v79
    %v81 = vsel %vm33, %v68, 0.0
    %v82 = vadd.f32 %v80, %v81
    %v83 = vsel %vm33, %v69, 0.0
    %v84 = vadd.f32 %v82, %v83
    %v85 = vsel %vm33, %v70, 0.0
    %v86 = vadd.f32 %v84, %v85
    %v87 = vsel %vm33, %v71, 0.0
    %v88 = vadd.f32 %v86, %v87
    %v89 = vsel %vm33, %v72, 0.0
    %v90 = vadd.f32 %v88, %v89
    %v91 = vsel %vm33, %v73, 0.0
    %v92 = vadd.f32 %v90, %v91
    %v93 = vmul.f32 %v92, 0.1
    %v94 = vrsqrt.pop %v93
    %v95 = vmul.f32 %v93, %v94
    %vm96 = vcmp.eq.f32.partialorder %v93, inf
    %v97 = vsel %vm96, %v93, %v95
    %vm98 = vcmp.eq.f32.partialorder %v93, 0.0
    %v99 = vand.u32 %v93, 2147483648
    %v100 = vsel %vm98, %v99, %v97
    %vm101 = vcmp.lt.f32.partialorder %v100, 0.0
    %v102 = vsub.f32 %v100, 1e-07
    %v103 = vadd.f32 %v100, 1e-07
    %v104 = vsel %vm101, %v102, %v103
    %v105 = vrcp.pop %v104
    %v106 = vmul.f32 %v53, %v105
    %v107 = vmul.f32 %v23, 0.018181818
    %v108 = vmul.f32 %v24, 0.036363635
    %v109 = vadd.f32 %v107, %v108
    %v110 = vmul.f32 %v25, 0.054545455
    %v111 = vadd.f32 %v109, %v110
    %v112 = vmul.f32 %v26, 0.07272727
    %v113 = vadd.f32 %v111, %v112
    %v114 = vmul.f32 %v27, 0.09090909
    %v115 = vadd.f32 %v113, %v114
    %v116 = vmul.f32 %v28, 0.10909091
    %v117 = vadd.f32 %v115, %v116
    %v118 = vmul.f32 %v29, 0.12727273
    %v119 = vadd.f32 %v117, %v118
    %v120 = vmul.f32 %v30, 0.14545454
    %v121 = vadd.f32 %v119, %v120
    %v122 = vmul.f32 %v31, 0.16363636
    %v123 = vadd.f32 %v121, %v122
    %v124 = vmul.f32 %v32, 0.18181819
    %v125 = vadd.f32 %v123, %v124
    %vm126 = vcmp.lt.f32.partialorder %v23, 0.0
    %v127 = vsub.f32 %v23, 1e-07
    %v128 = vadd.f32 %v23, 1e-07
    %v129 = vsel %vm126, %v127, %v128
    %v130 = vrcp.pop %v129
    %v131 = vmul.f32 %v32, %v130
    %v132 = vsub.f32 %v131, 1.0
    %133 = vst [vmem:[#allocation5] sm:$0xf] %v100
    %134 = vst [vmem:[#allocation5 + $0x4] sm:$0xf] %v106
    %135 = vst [vmem:[#allocation5 + $0x8] sm:$0xf] %v125
    %136 = vst [vmem:[#allocation5 + $0xc] sm:$0xf] %v132
    %v147 = vrot.slane %v54, 7
    %v148 = vrot.slane %v55, 7
    %v149 = vrot.slane %v56, 7
    %v150 = vrot.slane %v57, 7
    %v151 = vrot.slane %v58, 7
    %v152 = vrot.slane %v59, 7
    %v153 = vrot.slane %v60, 7
    %v154 = vrot.slane %v61, 7
    %v155 = vrot.slane %v62, 7
    %v156 = vrot.slane %v63, 7
    %v167 = vmul.f32 %v54, %v147
    %v168 = vmul.f32 %v55, %v148
    %v169 = vmul.f32 %v56, %v149
    %v170 = vmul.f32 %v57, %v150
    %v171 = vmul.f32 %v58, %v151
    %v172 = vmul.f32 %v59, %v152
    %v173 = vmul.f32 %v60, %v153
    %v174 = vmul.f32 %v61, %v154
    %v175 = vmul.f32 %v62, %v155
    %v176 = vmul.f32 %v63, %v156
    %vm177 = vcmask 1041409
    %v178 = vsel %vm177, %v167, 0.0
    %v179 = vsel %vm177, %v168, 0.0
    %v180 = vadd.f32 %v178, %v179
    %v181 = vsel %vm177, %v169, 0.0
    %v182 = vadd.f32 %v180, %v181
    %v183 = vsel %vm177, %v170, 0.0
    %v184 = vadd.f32 %v182, %v183
    %v185 = vsel %vm177, %v171, 0.0
    %v186 = vadd.f32 %v184, %v185
    %v187 = vsel %vm177, %v172, 0.0
    %v188 = vadd.f32 %v186, %v187
    %v189 = vsel %vm177, %v173, 0.0
    %v190 = vadd.f32 %v188, %v189
    %v191 = vsel %vm177, %v174, 0.0
    %v192 = vadd.f32 %v190, %v191
    %v193 = vsel %vm177, %v175, 0.0
    %v194 = vadd.f32 %v192, %v193
    %v195 = vsel %vm177, %v176, 0.0
    %v196 = vadd.f32 %v194, %v195
    %v197 = vmul.f32 %v196, 0.11111111
    %198 = vst [vmem:[#allocation5 + $0xf] sm:$0x2] %v197
    %v200 = vrot.slane %v100, 7
    %v202 = vmul.f32 %v100, %v200
    %vm203 = vcmp.lt.f32.partialorder %v202, 0.0
    %v204 = vsub.f32 %v202, 1e-07
    %v205 = vadd.f32 %v202, 1e-07
    %v206 = vsel %vm203, %v204, %v205
    %v207 = vmul.f32 %v196, 0.1
    %v208 = vrcp.pop %v206
    %v209 = vmul.f32 %v207, %v208
    %210 = vst [vmem:[#allocation5 + $0x15] sm:$0x2] %v209
    %v211 = vrot.slane %v54, 6
    %v212 = vrot.slane %v55, 6
    %v213 = vrot.slane %v56, 6
    %v214 = vrot.slane %v57, 6
    %v215 = vrot.slane %v58, 6
    %v216 = vrot.slane %v59, 6
    %v217 = vrot.slane %v60, 6
    %v218 = vrot.slane %v61, 6
    %v219 = vrot.slane %v62, 6
    %v220 = vrot.slane %v63, 6
    %v231 = vmul.f32 %v54, %v211
    %v232 = vmul.f32 %v55, %v212
    %v233 = vmul.f32 %v56, %v213
    %v234 = vmul.f32 %v57, %v214
    %v235 = vmul.f32 %v58, %v215
    %v236 = vmul.f32 %v59, %v216
    %v237 = vmul.f32 %v60, %v217
    %v238 = vmul.f32 %v61, %v218
    %v239 = vmul.f32 %v62, %v219
    %v240 = vmul.f32 %v63, %v220
    %vm241 = vcmask 1042434
    %v242 = vsel %vm241, %v231, 0.0
    %v243 = vsel %vm241, %v232, 0.0
    %v244 = vadd.f32 %v242, %v243
    %v245 = vsel %vm241, %v233, 0.0
    %v246 = vadd.f32 %v244, %v245
    %v247 = vsel %vm241, %v234, 0.0
    %v248 = vadd.f32 %v246, %v247
    %v249 = vsel %vm241, %v235, 0.0
    %v250 = vadd.f32 %v248, %v249
    %v251 = vsel %vm241, %v236, 0.0
    %v252 = vadd.f32 %v250, %v251
    %v253 = vsel %vm241, %v237, 0.0
    %v254 = vadd.f32 %v252, %v253
    %v255 = vsel %vm241, %v238, 0.0
    %v256 = vadd.f32 %v254, %v255
    %v257 = vsel %vm241, %v239, 0.0
    %v258 = vadd.f32 %v256, %v257
    %v259 = vsel %vm241, %v240, 0.0
    %v260 = vadd.f32 %v258, %v259
    %v261 = vmul.f32 %v260, 0.11111111
    %262 = vst [vmem:[#allocation5 + $0xf] sm:$0x4] %v261
    %v263 = vrot.slane %v100, 6
    %v265 = vmul.f32 %v100, %v263
    %vm266 = vcmp.lt.f32.partialorder %v265, 0.0
    %v267 = vsub.f32 %v265, 1e-07
    %v268 = vadd.f32 %v265, 1e-07
    %v269 = vsel %vm266, %v267, %v268
    %v270 = vmul.f32 %v260, 0.1
    %v271 = vrcp.pop %v269
    %v272 = vmul.f32 %v270, %v271
    %273 = vst [vmem:[#allocation5 + $0x15] sm:$0x4] %v272
    %v274 = vsel %vm241, %v167, 0.0
    %v275 = vsel %vm241, %v168, 0.0
    %v276 = vadd.f32 %v274, %v275
    %v277 = vsel %vm241, %v169, 0.0
    %v278 = vadd.f32 %v276, %v277
    %v279 = vsel %vm241, %v170, 0.0
    %v280 = vadd.f32 %v278, %v279
    %v281 = vsel %vm241, %v171, 0.0
    %v282 = vadd.f32 %v280, %v281
    %v283 = vsel %vm241, %v172, 0.0
    %v284 = vadd.f32 %v282, %v283
    %v285 = vsel %vm241, %v173, 0.0
    %v286 = vadd.f32 %v284, %v285
    %v287 = vsel %vm241, %v174, 0.0
    %v288 = vadd.f32 %v286, %v287
    %v289 = vsel %vm241, %v175, 0.0
    %v290 = vadd.f32 %v288, %v289
    %v291 = vsel %vm241, %v176, 0.0
    %v292 = vadd.f32 %v290, %v291
    %v293 = vmul.f32 %v292, 0.11111111
    %294 = vst [vmem:[#allocation5 + $0x10] sm:$0x4] %v293
    %v295 = vmul.f32 %v292, 0.1
    %v296 = vmul.f32 %v295, %v208
    %297 = vst [vmem:[#allocation5 + $0x16] sm:$0x4] %v296
    %v298 = vrot.slane %v54, 5
    %v299 = vrot.slane %v55, 5
    %v300 = vrot.slane %v56, 5
    %v301 = vrot.slane %v57, 5
    %v302 = vrot.slane %v58, 5
    %v303 = vrot.slane %v59, 5
    %v304 = vrot.slane %v60, 5
    %v305 = vrot.slane %v61, 5
    %v306 = vrot.slane %v62, 5
    %v307 = vrot.slane %v63, 5
    %v318 = vmul.f32 %v54, %v298
    %v319 = vmul.f32 %v55, %v299
    %v320 = vmul.f32 %v56, %v300
    %v321 = vmul.f32 %v57, %v301
    %v322 = vmul.f32 %v58, %v302
    %v323 = vmul.f32 %v59, %v303
    %v324 = vmul.f32 %v60, %v304
    %v325 = vmul.f32 %v61, %v305
    %v326 = vmul.f32 %v62, %v306
    %v327 = vmul.f32 %v63, %v307
    %vm328 = vcmask 1043459
    %v329 = vsel %vm328, %v318, 0.0
    %v330 = vsel %vm328, %v319, 0.0
    %v331 = vadd.f32 %v329, %v330
    %v332 = vsel %vm328, %v320, 0.0
    %v333 = vadd.f32 %v331, %v332
    %v334 = vsel %vm328, %v321, 0.0
    %v335 = vadd.f32 %v333, %v334
    %v336 = vsel %vm328, %v322, 0.0
    %v337 = vadd.f32 %v335, %v336
    %v338 = vsel %vm328, %v323, 0.0
    %v339 = vadd.f32 %v337, %v338
    %v340 = vsel %vm328, %v324, 0.0
    %v341 = vadd.f32 %v339, %v340
    %v342 = vsel %vm328, %v325, 0.0
    %v343 = vadd.f32 %v341, %v342
    %v344 = vsel %vm328, %v326, 0.0
    %v345 = vadd.f32 %v343, %v344
    %v346 = vsel %vm328, %v327, 0.0
    %v347 = vadd.f32 %v345, %v346
    %v348 = vmul.f32 %v347, 0.11111111
    %349 = vst [vmem:[#allocation5 + $0x10] sm:$0x8] %v348
    %v350 = vrot.slane %v100, 5
    %v352 = vmul.f32 %v100, %v350
    %vm353 = vcmp.lt.f32.partialorder %v352, 0.0
    %v354 = vsub.f32 %v352, 1e-07
    %v355 = vadd.f32 %v352, 1e-07
    %v356 = vsel %vm353, %v354, %v355
    %v357 = vmul.f32 %v347, 0.1
    %v358 = vrcp.pop %v356
    %v359 = vmul.f32 %v357, %v358
    %360 = vst [vmem:[#allocation5 + $0x16] sm:$0x8] %v359
    %v361 = vsel %vm328, %v231, 0.0
    %v362 = vsel %vm328, %v232, 0.0
    %v363 = vadd.f32 %v361, %v362
    %v364 = vsel %vm328, %v233, 0.0
    %v365 = vadd.f32 %v363, %v364
    %v366 = vsel %vm328, %v234, 0.0
    %v367 = vadd.f32 %v365, %v366
    %v368 = vsel %vm328, %v235, 0.0
    %v369 = vadd.f32 %v367, %v368
    %v370 = vsel %vm328, %v236, 0.0
    %v371 = vadd.f32 %v369, %v370
    %v372 = vsel %vm328, %v237, 0.0
    %v373 = vadd.f32 %v371, %v372
    %v374 = vsel %vm328, %v238, 0.0
    %v375 = vadd.f32 %v373, %v374
    %v376 = vsel %vm328, %v239, 0.0
    %v377 = vadd.f32 %v375, %v376
    %v378 = vsel %vm328, %v240, 0.0
    %v379 = vadd.f32 %v377, %v378
    %v380 = vmul.f32 %v379, 0.11111111
    %381 = vst [vmem:[#allocation5 + $0x11] sm:$0x8] %v380
    %v382 = vmul.f32 %v379, 0.1
    %v383 = vmul.f32 %v382, %v271
    %384 = vst [vmem:[#allocation5 + $0x17] sm:$0x8] %v383
    %v385 = vsel %vm328, %v167, 0.0
    %v386 = vsel %vm328, %v168, 0.0
    %v387 = vadd.f32 %v385, %v386
    %v388 = vsel %vm328, %v169, 0.0
    %v389 = vadd.f32 %v387, %v388
    %v390 = vsel %vm328, %v170, 0.0
    %v391 = vadd.f32 %v389, %v390
    %v392 = vsel %vm328, %v171, 0.0
    %v393 = vadd.f32 %v391, %v392
    %v394 = vsel %vm328, %v172, 0.0
    %v395 = vadd.f32 %v393, %v394
    %v396 = vsel %vm328, %v173, 0.0
    %v397 = vadd.f32 %v395, %v396
    %v398 = vsel %vm328, %v174, 0.0
    %v399 = vadd.f32 %v397, %v398
    %v400 = vsel %vm328, %v175, 0.0
    %v401 = vadd.f32 %v399, %v400
    %v402 = vsel %vm328, %v176, 0.0
    %v403 = vadd.f32 %v401, %v402
    %v404 = vmul.f32 %v403, 0.11111111
    %405 = vst [vmem:[#allocation5 + $0x12] sm:$0x8] %v404
    %v406 = vmul.f32 %v403, 0.1
    %v407 = vmul.f32 %v406, %v208
    %408 = vst [vmem:[#allocation5 + $0x18] sm:$0x8] %v407
    // Predicated region
    $region10: #{tpu_custom_call.1} parent=1 // pred_check
      _
    $region11: #{tpu_custom_call.1} parent=1 // pred_check_branch
      %410 = sbr.rel (0) target = $region13
    $region12: #{tpu_custom_call.1} parent=1 // pred_region
      %s412 = ssub.s32 512, 512
      %413 = vsyncadd [#allocation4], %s412
      %s414 = sshll.u32 [#allocation5], 4
      %s415 = int_to_ptr.vmem [resolvable:$true] %s414
      %420 = dma.vmem_to_hbm [thread:$0]  %s415, 512, %s1, [#allocation4], 128, 128, 8
    $region13: #{tpu_custom_call.1} parent=1 // pred_fallthru
      _
    // Predicated region
    $region14: #{tpu_custom_call.1} parent=1 // pred_check
      _
    $region15: #{tpu_custom_call.1} parent=1 // pred_check_branch
      %422 = sbr.rel (0) target = $region17
    $region16: #{tpu_custom_call.1} parent=1 // pred_region
      %423 = dma.done [#allocation4], 512
    $region17: #{tpu_custom_call.1} parent=1 // pred_fallthru
      _
    %424 = vsyncpa [#allocation3], 1
    %425 = vsyncpa [#allocation4], 1

</llo_original>
